<compile_context>
chip_gen: v5e
topology: v5e:2x2
jax: 0.10.0
libtpu: 0.0.40
codegen_flags: <defaults>
</compile_context>

<pallas_src>
import jax
import jax.numpy as jnp
from jax.experimental import pallas as pl
from jax.experimental.pallas import tpu as pltpu


def tag_embedding_kernel(ids_ref, tab_ref, w_ref, b_ref, o_ref):
    """Per tile: one-hot gather (MXU) -> LayerNorm stats -> fused Linear (MXU)."""
    ids = ids_ref[...]                                    # (tile_n, 1) int32
    tile_n = ids.shape[0]
    vocab = tab_ref.shape[0]

    # --- embedding lookup as one-hot @ table (exact gather for small vocab) ---
    vocab_iota = jax.lax.broadcasted_iota(jnp.int32, (tile_n, vocab), 1)
    onehot = (vocab_iota == ids).astype(jnp.float32)      # (tile_n, V)
    emb = jnp.dot(onehot, tab_ref[...],
                  preferred_element_type=jnp.float32)     # (tile_n, H)

    # --- LayerNorm normalization (TF-style eps inside the sqrt).  The affine
    #     weight/bias is folded into w_ref / b_ref by the wrapper. ---
    u = jnp.mean(emb, axis=-1, keepdims=True)
    d = emb - u
    s = jnp.mean(d * d, axis=-1, keepdims=True)
    x = d * jax.lax.rsqrt(s + 1e-12)                      # (tile_n, H)

    # (dropouts are identity in eval mode)

    # --- fused projection: x @ (diag(ln_w) @ W^T) + (ln_b @ W^T + b) ---
    logit = jnp.dot(x, w_ref[...], preferred_element_type=jnp.float32) + b_ref[...]
    o_ref[...] = logit.astype(o_ref.dtype)


def tag_embedding_forward(flat_input_ids, params, *, tile_n=256):
    """flat_input_ids: (B, S) int -> logits (B, S, output_dim) float32."""
    table = params["tag_embeddings"].astype(jnp.float32)   # (V, H), row 0 zeroed
    ln_w = params["ln_weight"].astype(jnp.float32)          # (H,)
    ln_b = params["ln_bias"].astype(jnp.float32)            # (H,)
    fc_w = params["fc_weight"].astype(jnp.float32)          # (O, H)
    fc_b = params["fc_bias"].astype(jnp.float32)            # (O,)

    B, S = flat_input_ids.shape
    N = B * S
    V, H = table.shape
    O = fc_w.shape[0]

    # Fold the LayerNorm affine into the Linear (exact algebraic fold).
    w_fused = fc_w.T * ln_w[:, None]                      # (H, O)
    b_fused = ln_b @ fc_w.T + fc_b                        # (O,)

    # Lane-dense output: pad the output feature axis up to a multiple of 128.
    o_pad = ((O + 127) // 128) * 128
    if o_pad != O:
        w_fused = jnp.pad(w_fused, ((0, 0), (0, o_pad - O)))
        b_fused = jnp.pad(b_fused, ((0, o_pad - O),))
    b_fused = b_fused.reshape(1, o_pad)

    # Effective token tile: 256 (MXU-friendly) for big N, clamped to the
    # 8-aligned token count for small N so padded rows don't waste compute.
    n_aligned = ((N + 7) // 8) * 8
    tile_n_eff = int(max(8, min(tile_n, n_aligned)))

    # Pad the token axis to a multiple of tile_n_eff.  Padding uses id 0, whose
    # embedding row is all zeros (padding_idx) => numerically harmless; the
    # padded rows are stripped after the call.
    grid_n = max(1, -(-N // tile_n_eff))
    n_pad = grid_n * tile_n_eff
    ids = flat_input_ids.reshape(N).astype(jnp.int32)
    if n_pad != N:
        ids = jnp.pad(ids, (0, n_pad - N))
    ids = ids.reshape(n_pad, 1)

    # VMEM budget: grid-invariant operands + double-buffered ids/out tiles,
    # with generous slack; clamped well under v7x's 64 MiB physical VMEM.
    block_bytes = ((V * H + H * o_pad + o_pad) * 4
                   + 2 * tile_n_eff * (1 + o_pad) * 4)
    vmem_limit = int(min(max(4 * block_bytes + (1 << 20), 8 << 20), 48 << 20))

    out = pl.pallas_call(
        tag_embedding_kernel,
        out_shape=jax.ShapeDtypeStruct((n_pad, o_pad), jnp.float32),
        grid_spec=pltpu.PrefetchScalarGridSpec(
            num_scalar_prefetch=0,
            grid=(grid_n,),
            in_specs=[
                pl.BlockSpec((tile_n_eff, 1), lambda i: (i, 0)),  # token ids tile
                pl.BlockSpec((V, H), lambda i: (0, 0)),           # embedding table
                pl.BlockSpec((H, o_pad), lambda i: (0, 0)),       # fused weight^T
                pl.BlockSpec((1, o_pad), lambda i: (0, 0)),       # fused bias
            ],
            out_specs=pl.BlockSpec((tile_n_eff, o_pad), lambda i: (i, 0)),
        ),
        compiler_params=pltpu.CompilerParams(
            dimension_semantics=("parallel",),
            vmem_limit_bytes=vmem_limit,
        ),
    )(ids, table, w_fused, b_fused)

    return out[:N, :O].reshape(B, S, O)


def init_params(key, *, tag_vocab_size, hidden_size, output_dim):
    k1, k2, k3 = jax.random.split(key, 3)
    # nn.Embedding: N(0,1) init; padding_idx=0 row zeroed.
    table = jax.random.normal(k1, (tag_vocab_size, hidden_size), jnp.float32)
    table = table.at[0].set(0.0)
    # LayerNorm: weight=1, bias=0.
    ln_weight = jnp.ones((hidden_size,), jnp.float32)
    ln_bias = jnp.zeros((hidden_size,), jnp.float32)
    # nn.Linear: uniform(-1/sqrt(H), 1/sqrt(H)).
    bound = 1.0 / (hidden_size ** 0.5)
    fc_weight = jax.random.uniform(k2, (output_dim, hidden_size), jnp.float32,
                                   minval=-bound, maxval=bound)
    fc_bias = jax.random.uniform(k3, (output_dim,), jnp.float32,
                                 minval=-bound, maxval=bound)
    return {
        "tag_embeddings": table,
        "ln_weight": ln_weight,
        "ln_bias": ln_bias,
        "fc_weight": fc_weight,
        "fc_bias": fc_bias,
    }


def reference_forward(flat_input_ids, params, eps=1e-12):
    """Pure-JAX reference mirroring the PyTorch module (eval mode)."""
    emb = params["tag_embeddings"][flat_input_ids]              # (B, S, H)
    u = emb.mean(-1, keepdims=True)
    s = ((emb - u) ** 2).mean(-1, keepdims=True)
    x = (emb - u) / jnp.sqrt(s + eps)
    x = params["ln_weight"] * x + params["ln_bias"]
    return x @ params["fc_weight"].T + params["fc_bias"]        # (B, S, O)


if __name__ == "__main__":
    B, S = 2, 8
    TAG_VOCAB = 16
    HIDDEN = 32
    OUTPUT_DIM = 8

    key = jax.random.PRNGKey(0)
    kp, kx, kw, kb = jax.random.split(key, 4)
    params = init_params(kp, tag_vocab_size=TAG_VOCAB,
                         hidden_size=HIDDEN, output_dim=OUTPUT_DIM)
    flat_input_ids = jax.random.randint(kx, (B, S), 0, TAG_VOCAB, dtype=jnp.int32)

    # Check 1: default (PyTorch-style) init.
    out = tag_embedding_forward(flat_input_ids, params)
    out = jax.block_until_ready(out)
    ref = reference_forward(flat_input_ids, params)
    assert out.shape == (B, S, OUTPUT_DIM)
    assert jnp.allclose(out, ref, atol=1e-5, rtol=1e-5), "mismatch vs reference"

    # Check 2: non-trivial LayerNorm affine, to exercise the LN->Linear fold.
    params2 = dict(params)
    params2["ln_weight"] = 1.0 + 0.1 * jax.random.normal(kw, (HIDDEN,), jnp.float32)
    params2["ln_bias"] = 0.1 * jax.random.normal(kb, (HIDDEN,), jnp.float32)
    out2 = jax.block_until_ready(tag_embedding_forward(flat_input_ids, params2))
    ref2 = reference_forward(flat_input_ids, params2)
    assert jnp.allclose(out2, ref2, atol=1e-4, rtol=1e-4), "mismatch (folded affine)"

    # Check 3: larger, ragged token count to exercise multi-tile grid + padding.
    flat_big = jax.random.randint(jax.random.PRNGKey(7), (3, 200), 0, TAG_VOCAB,
                                  dtype=jnp.int32)
    out3 = jax.block_until_ready(tag_embedding_forward(flat_big, params2))
    ref3 = reference_forward(flat_big, params2)
    assert out3.shape == ref3.shape
    assert jnp.allclose(out3, ref3, atol=1e-4, rtol=1e-4), "mismatch (multi-tile)"

    print("KERNEL_OK")
</pallas_src>

<mosaic_0001>
module attributes {stable_mosaic.version = 11 : i64} {
  func.func @tag_embedding_kernel(%arg0: i32, %arg1: memref<16x1xi32, #tpu.memory_space<vmem>>, %arg2: memref<16x32xf32, #tpu.memory_space<vmem>>, %arg3: memref<32x128xf32, #tpu.memory_space<vmem>>, %arg4: memref<1x128xf32, #tpu.memory_space<vmem>>, %arg5: memref<16x128xf32, #tpu.memory_space<vmem>>) attributes {dimension_semantics = [#tpu.dimension_semantics<parallel>], iteration_bounds = array<i64: 1>, scalar_prefetch = 0 : i64, scratch_operands = 0 : i64, tpu.core_type = #tpu.core_type<tc>, window_params = [{transform_indices = @transform_0, window_bounds = array<i64: 16, 1>}, {pipeline_mode = #tpu.pipeline_mode<synchronous>, transform_indices = @transform_1, window_bounds = array<i64: 16, 32>}, {pipeline_mode = #tpu.pipeline_mode<synchronous>, transform_indices = @transform_2, window_bounds = array<i64: 32, 128>}, {pipeline_mode = #tpu.pipeline_mode<synchronous>, transform_indices = @transform_3, window_bounds = array<i64: 1, 128>}, {transform_indices = @transform_4, window_bounds = array<i64: 16, 128>}]} {
    %c0 = arith.constant 0 : index
    %c0_0 = arith.constant 0 : index
    %0 = vector.load %arg1[%c0, %c0_0] : memref<16x1xi32, #tpu.memory_space<vmem>>, vector<16x1xi32>
    %1 = tpu.iota {dimensions = array<i32: 1>} : vector<16x16xi32>
    %2 = vector.broadcast %0 : vector<16x1xi32> to vector<16x16xi32>
    %3 = arith.cmpi eq, %1, %2 : vector<16x16xi32>
    %4 = arith.extui %3 : vector<16x16xi1> to vector<16x16xi32>
    %5 = arith.sitofp %4 : vector<16x16xi32> to vector<16x16xf32>
    %c0_1 = arith.constant 0 : index
    %c0_2 = arith.constant 0 : index
    %6 = vector.load %arg2[%c0_1, %c0_2] : memref<16x32xf32, #tpu.memory_space<vmem>>, vector<16x32xf32>
    %cst = arith.constant dense<0.000000e+00> : vector<16x32xf32>
    %7 = tpu.matmul %5, %6, %cst {dimension_numbers = #tpu.dot_dimension_numbers<[1], [0], [0], [1], [0, 0, 1, 1], [], []>} : vector<16x16xf32>, vector<16x32xf32>, vector<16x32xf32> -> vector<16x32xf32>
    %cst_3 = arith.constant dense<0.000000e+00> : vector<16xf32>
    %8 = vector.multi_reduction <add>, %7, %cst_3 [1] : vector<16x32xf32> to vector<16xf32>
    %9 = vector.shape_cast %8 : vector<16xf32> to vector<16x1xf32>
    %cst_4 = arith.constant 3.200000e+01 : f32
    %10 = vector.broadcast %cst_4 : f32 to vector<16x1xf32>
    %11 = arith.divf %9, %10 : vector<16x1xf32>
    %12 = vector.broadcast %11 : vector<16x1xf32> to vector<16x32xf32>
    %13 = arith.subf %7, %12 : vector<16x32xf32>
    %14 = arith.mulf %13, %13 : vector<16x32xf32>
    %cst_5 = arith.constant dense<0.000000e+00> : vector<16xf32>
    %15 = vector.multi_reduction <add>, %14, %cst_5 [1] : vector<16x32xf32> to vector<16xf32>
    %16 = vector.shape_cast %15 : vector<16xf32> to vector<16x1xf32>
    %cst_6 = arith.constant 3.200000e+01 : f32
    %17 = vector.broadcast %cst_6 : f32 to vector<16x1xf32>
    %18 = arith.divf %16, %17 : vector<16x1xf32>
    %cst_7 = arith.constant 9.99999996E-13 : f32
    %19 = vector.broadcast %cst_7 : f32 to vector<16x1xf32>
    %20 = arith.addf %18, %19 : vector<16x1xf32>
    %21 = math.rsqrt %20 : vector<16x1xf32>
    %22 = vector.broadcast %21 : vector<16x1xf32> to vector<16x32xf32>
    %23 = arith.mulf %13, %22 : vector<16x32xf32>
    %c0_8 = arith.constant 0 : index
    %c0_9 = arith.constant 0 : index
    %24 = vector.load %arg3[%c0_8, %c0_9] : memref<32x128xf32, #tpu.memory_space<vmem>>, vector<32x128xf32>
    %cst_10 = arith.constant dense<0.000000e+00> : vector<16x128xf32>
    %25 = tpu.matmul %23, %24, %cst_10 {dimension_numbers = #tpu.dot_dimension_numbers<[1], [0], [0], [1], [0, 0, 1, 1], [], []>} : vector<16x32xf32>, vector<32x128xf32>, vector<16x128xf32> -> vector<16x128xf32>
    %c0_11 = arith.constant 0 : index
    %c0_12 = arith.constant 0 : index
    %26 = vector.load %arg4[%c0_11, %c0_12] : memref<1x128xf32, #tpu.memory_space<vmem>>, vector<1x128xf32>
    %27 = vector.broadcast %26 : vector<1x128xf32> to vector<16x128xf32>
    %28 = arith.addf %25, %27 : vector<16x128xf32>
    %c0_13 = arith.constant 0 : index
    %c0_14 = arith.constant 0 : index
    %29 = vector.load %arg5[%c0_13, %c0_14] : memref<16x128xf32, #tpu.memory_space<vmem>>, vector<16x128xf32>
    tpu.vector_store %arg5[%c0_13, %c0_14], %28 {strides = array<i32>} : memref<16x128xf32, #tpu.memory_space<vmem>>, vector<16x128xf32>,
    return
  }
  func.func @transform_0(%arg0: i32) -> (i32, i32) {
    %c0_i32 = arith.constant 0 : i32
    %c0_i32_0 = arith.constant 0 : i32
    return %arg0, %c0_i32 : i32, i32
  }
  func.func @transform_1(%arg0: i32) -> (i32, i32) {
    %c0_i32 = arith.constant 0 : i32
    %c0_i32_0 = arith.constant 0 : i32
    %c0_i32_1 = arith.constant 0 : i32
    return %c0_i32, %c0_i32_0 : i32, i32
  }
  func.func @transform_2(%arg0: i32) -> (i32, i32) {
    %c0_i32 = arith.constant 0 : i32
    %c0_i32_0 = arith.constant 0 : i32
    %c0_i32_1 = arith.constant 0 : i32
    return %c0_i32, %c0_i32_0 : i32, i32
  }
  func.func @transform_3(%arg0: i32) -> (i32, i32) {
    %c0_i32 = arith.constant 0 : i32
    %c0_i32_0 = arith.constant 0 : i32
    %c0_i32_1 = arith.constant 0 : i32
    return %c0_i32, %c0_i32_0 : i32, i32
  }
  func.func @transform_4(%arg0: i32) -> (i32, i32) {
    %c0_i32 = arith.constant 0 : i32
    %c0_i32_0 = arith.constant 0 : i32
    return %arg0, %c0_i32 : i32, i32
  }
}

</mosaic_0001>

<llo_original>
// kernel: tpu_custom_call.1
$region0: #{tpu_custom_call.1}
  #allocation0 [shape = 'u32[]', space=smem, size = 0x4, offset = 0x4, fixed_abs, tag = 'smem constant byte address 0x4 - core index']
  #allocation1 [shape = 'u32[72,128]{1,0:T(1,128)}', space=vmem, size = 0x9000, scoped, tag = 'internal scratch']
  %s0 = inlined_call_operand.vmem [shape: s32[16,1], index: 0, kind: input, shape index: {}]
  %s1 = inlined_call_operand.vmem [shape: f32[16,32], index: 1, kind: input, shape index: {}]
  %s2 = inlined_call_operand.hbm [shape: f32[32,128], index: 2, kind: input, shape index: {}]
  %s3 = inlined_call_operand.vmem [shape: f32[1,128], index: 3, kind: input, shape index: {}]
  %s4 = inlined_call_operand.hbm [shape: f32[16,128], index: 4, kind: output, shape index: {}]
  %s5 = sld [smem:[#allocation0]]
  $region30: #{tpu_custom_call.1} parent=0
    _
  %s7 = ssub.s32 1, %s5
  %s8 = scalar_select 0, %s7, %s5
  $region1: #{tpu_custom_call.1} parent=0
    #allocation2 [shape = 'u8[16384]{0}', space=vmem, size = 0x4000, scoped, tag = 'input window, operand 2, single buffered']
    #allocation3 [shape = 's32[1]{0}', space=sflag, size = 0x4, scoped, tag = 'scoped memory for tpu_custom_call.1']
    #allocation4 [shape = 's32[1]{0}', space=sflag, size = 0x4, scoped, tag = 'scoped memory for tpu_custom_call.1']
    #allocation5 [shape = 'u8[8192]{0}', space=vmem, size = 0x2000, scoped, tag = 'output window, operand 0, single buffered']
    %9 = vsyncpa [#allocation3], 0
    %10 = vsyncpa [#allocation4], 0
    // Predicated region
    $region2: #{tpu_custom_call.1} parent=1 // pred_check
      _
    $region3: #{tpu_custom_call.1} parent=1 // pred_check_branch
      %12 = sbr.rel (0) target = $region5
    $region4: #{tpu_custom_call.1} parent=1 // pred_region
      _
    $region5: #{tpu_custom_call.1} parent=1 // pred_fallthru
      _
    // Predicated region
    $region6: #{tpu_custom_call.1} parent=1 // pred_check
      _
    $region7: #{tpu_custom_call.1} parent=1 // pred_check_branch
      %14 = sbr.rel (0) target = $region9
    $region8: #{tpu_custom_call.1} parent=1 // pred_region
      _
    $region9: #{tpu_custom_call.1} parent=1 // pred_fallthru
      _
    // Predicated region
    $region10: #{tpu_custom_call.1} parent=1 // pred_check
      _
    $region11: #{tpu_custom_call.1} parent=1 // pred_check_branch
      %16 = sbr.rel (0) target = $region13
    $region12: #{tpu_custom_call.1} parent=1 // pred_region
      %18 = vsyncadd [#allocation3], 0
      %s19 = sshll.u32 %s2, 4
      %s20 = int_to_ptr.hbm [resolvable:$true] %s19
      %s21 = sshll.u32 [#allocation2], 4
      %s22 = int_to_ptr.vmem [resolvable:$true] %s21
      %27 = dma.hbm_to_vmem [thread:$0]  %s20, 512, %s22, [#allocation3], 128, 128, 8
    $region13: #{tpu_custom_call.1} parent=1 // pred_fallthru
      _
    // Predicated region
    $region14: #{tpu_custom_call.1} parent=1 // pred_check
      _
    $region15: #{tpu_custom_call.1} parent=1 // pred_check_branch
      %29 = sbr.rel (0) target = $region17
    $region16: #{tpu_custom_call.1} parent=1 // pred_region
      _
    $region17: #{tpu_custom_call.1} parent=1 // pred_fallthru
      _
    // Predicated region
    $region18: #{tpu_custom_call.1} parent=1 // pred_check
      _
    $region19: #{tpu_custom_call.1} parent=1 // pred_check_branch
      %31 = sbr.rel (0) target = $region21
    $region20: #{tpu_custom_call.1} parent=1 // pred_region
      %33 = dma.done [#allocation3], 512
    $region21: #{tpu_custom_call.1} parent=1 // pred_fallthru
      _
    %v34 = vld [vmem:[%s0] sm:$0xff]
    %v35 = vld [vmem:[%s0 + $0x8] sm:$0xff]
    %v36 = vlaneseq
    %v37 = vand.u32 %v36, 127
    %38 = vset.pattern.permute.xlu0 0
    %39 = vperm.xlu0 %38, %v34
    %v40 = vpop.permute.xlu0 %39
    %41 = vset.pattern.permute.xlu0 0
    %42 = vperm.xlu0 %41, %v35
    %v43 = vpop.permute.xlu0 %42
    %vm44 = vcmp.eq.s32.totalorder %v37, %v40
    %vm45 = vcmp.eq.s32.totalorder %v37, %v43
    %v46 = vsel %vm44, 1, 0
    %v47 = vsel %vm45, 1, 0
    %v48 = vcvt.s32.f32 %v46
    %v49 = vcvt.s32.f32 %v47
    %v50 = vld [vmem:[%s1] sm:$0xff]
    %v51 = vld [vmem:[%s1 + $0x8] sm:$0xff]
    %vm52 = vcmask 130048
    %v54 = vsel %vm52, %v48, 0
    %v57 = vsel %vm52, %v49, 0
    %59 = vmatpush.msra.mxu0 0.0
    %60 = vmatpush.msra.mxu0 0.0
    %61 = vmatpush.msra.mxu0 0.0
    %62 = vmatpush.msra.mxu0 0.0
    %63 = vmatpush.msra.mxu0 0.0
    %64 = vmatpush.msra.mxu0 0.0
    %65 = vmatpush.msra.mxu0 0.0
    %66 = vmatpush.msra.mxu0 0.0
    %67 = vmatpush.msra.mxu0 0.0
    %68 = vmatpush.msra.mxu0 0.0
    %69 = vmatpush.msra.mxu0 0.0
    %70 = vmatpush.msra.mxu0 0.0
    %71 = vmatpush.msra.mxu0 0.0
    %72 = vmatpush.msra.mxu0 0.0
    %73 = vmatpush.msra.mxu0 %v51
    %74 = vmatpush.msra.mxu0 %v50
    %75 = vmatmul.f32.gmra.mxu0 %v54
    %v76 = vpop.f32.mrf.mxu0
    %v77 = vadd.f32 0.0, %v76
    %78 = vmatmul.f32.gmra.mxu0 %v57
    %v79 = vpop.f32.mrf.mxu0
    %v80 = vadd.f32 0.0, %v79
    %81 = vdwg.mxu0
    %vm82 = vcmask 261120
    %v83 = vsel %vm82, %v77, 0.0
    %84 = vadd.xlane.f32.xlu0 %v83
    %v85 = vpop.xlane.xlu0 %84
    %v86 = vsel %vm82, %v80, 0.0
    %87 = vadd.xlane.f32.xlu0 %v86
    %v88 = vpop.xlane.xlu0 %87
    %v89 = vrcp.pop 32.0
    %v90 = vmul.f32 32.0, %v89
    %v91 = vsub.f32 1.0, %v90
    %v92 = vmul.f32 %v89, %v91
    %v93 = vadd.f32 %v89, %v92
    %vm94 = vweird.f32 %v89
    %v95 = vsel %vm94, %v89, %v93
    %v96 = vmul.f32 %v85, %v95
    %v97 = vmul.f32 %v88, %v95
    %v98 = vsub.f32 %v77, %v96
    %v99 = vsub.f32 %v80, %v97
    %v100 = vmul.f32 %v98, %v98
    %v101 = vmul.f32 %v99, %v99
    %v102 = vsel %vm82, %v100, 0.0
    %103 = vadd.xlane.f32.xlu0 %v102
    %v104 = vpop.xlane.xlu0 %103
    %v105 = vsel %vm82, %v101, 0.0
    %106 = vadd.xlane.f32.xlu0 %v105
    %v107 = vpop.xlane.xlu0 %106
    %v108 = vmul.f32 %v104, %v95
    %v109 = vmul.f32 %v107, %v95
    %v110 = vadd.f32 %v108, 1e-12
    %v111 = vadd.f32 %v109, 1e-12
    %v112 = vrsqrt.pop %v110
    %v113 = vmul.f32 %v112, %v110
    %v114 = vmul.f32 %v113, %v112
    %v115 = vmul.f32 0.5, %v114
    %v116 = vsub.f32 1.5, %v115
    %v117 = vmul.f32 %v112, %v116
    %vm118 = vweird.f32 %v110
    %vm119 = vweird.f32 %v112
    %vm120 = vmor %vm118, %vm119
    %v121 = vsel %vm120, %v112, %v117
    %v122 = vrsqrt.pop %v111
    %v123 = vmul.f32 %v122, %v111
    %v124 = vmul.f32 %v123, %v122
    %v125 = vmul.f32 0.5, %v124
    %v126 = vsub.f32 1.5, %v125
    %v127 = vmul.f32 %v122, %v126
    %vm128 = vweird.f32 %v111
    %vm129 = vweird.f32 %v122
    %vm130 = vmor %vm128, %vm129
    %v131 = vsel %vm130, %v122, %v127
    %v132 = vmul.f32 %v98, %v121
    %v133 = vmul.f32 %v99, %v131
    %v134 = vld [vmem:[#allocation2] sm:$0xff]
    %v135 = vld [vmem:[#allocation2 + $0x8] sm:$0xff]
    %v136 = vld [vmem:[#allocation2 + $0x10] sm:$0xff]
    %v137 = vld [vmem:[#allocation2 + $0x18] sm:$0xff]
    %v138 = vld [vmem:[%s3] sm:$0x1]
    %v140 = vperm.slane %v138, 0
    %v143 = vsel %vm82, %v132, 0
    %v146 = vsel %vm82, %v133, 0
    %148 = vmatpush.msra.mxu0 0.0
    %149 = vmatpush.msra.mxu0 0.0
    %150 = vmatpush.msra.mxu0 0.0
    %151 = vmatpush.msra.mxu0 0.0
    %152 = vmatpush.msra.mxu0 0.0
    %153 = vmatpush.msra.mxu0 0.0
    %154 = vmatpush.msra.mxu0 0.0
    %155 = vmatpush.msra.mxu0 0.0
    %156 = vmatpush.msra.mxu0 0.0
    %157 = vmatpush.msra.mxu0 0.0
    %158 = vmatpush.msra.mxu0 0.0
    %159 = vmatpush.msra.mxu0 0.0
    %160 = vmatpush.msra.mxu0 %v137
    %161 = vmatpush.msra.mxu0 %v136
    %162 = vmatpush.msra.mxu0 %v135
    %163 = vmatpush.msra.mxu0 %v134
    %164 = vmatmul.f32.gmra.mxu0 %v143
    %v165 = vpop.f32.mrf.mxu0
    %v166 = vadd.f32 %v140, %v165
    %167 = vmatmul.f32.gmra.mxu0 %v146
    %v168 = vpop.f32.mrf.mxu0
    %v169 = vadd.f32 %v140, %v168
    %170 = vdwg.mxu0
    %171 = vst [vmem:[#allocation5] sm:$0xff] %v166
    %172 = vst [vmem:[#allocation5 + $0x8] sm:$0xff] %v169
    // Predicated region
    $region22: #{tpu_custom_call.1} parent=1 // pred_check
      _
    $region23: #{tpu_custom_call.1} parent=1 // pred_check_branch
      %174 = sbr.rel (0) target = $region25
    $region24: #{tpu_custom_call.1} parent=1 // pred_region
      %176 = vsyncadd [#allocation4], 0
      %s177 = sshll.u32 [#allocation5], 4
      %s178 = int_to_ptr.vmem [resolvable:$true] %s177
      %s179 = sshll.u32 %s4, 4
      %s180 = int_to_ptr.hbm [resolvable:$true] %s179
      %185 = dma.vmem_to_hbm [thread:$0]  %s178, 256, %s180, [#allocation4], 128, 128, 8
    $region25: #{tpu_custom_call.1} parent=1 // pred_fallthru
      _
    // Predicated region
    $region26: #{tpu_custom_call.1} parent=1 // pred_check
      _
    $region27: #{tpu_custom_call.1} parent=1 // pred_check_branch
      %187 = sbr.rel (0) target = $region29
    $region28: #{tpu_custom_call.1} parent=1 // pred_region
      %189 = dma.done [#allocation4], 256
    $region29: #{tpu_custom_call.1} parent=1 // pred_fallthru
      _
    %190 = vsyncpa [#allocation3], 1
    %191 = vsyncpa [#allocation4], 1

</llo_original>
